<compile_context>
chip_gen: v7x
topology: tpu7x:2x2x1
jax: 0.10.0
libtpu: 0.0.40
codegen_flags: <defaults>
</compile_context>

<pallas_src>
import jax
import jax.numpy as jnp
from jax.experimental import pallas as pl
from jax.experimental.pallas import tpu as pltpu


def _dice_partial_kernel(p_ref, t_ref, o_ref, sums_ref):
    # p_ref/t_ref: (1, 1, block_h, W) channel-0 tile of one image.
    # o_ref: (1, 8, 128) per-image partial-sum block.
    # sums_ref (SMEM, (2,)): [intersection, sum_pred + sum_true]
    h = pl.program_id(1)

    @pl.when(h == 0)
    def _init():
        sums_ref[0] = 0.0
        sums_ref[1] = 0.0

    p = p_ref[...].astype(jnp.float32)
    t = t_ref[...].astype(jnp.float32)
    sums_ref[0] += jnp.sum(p * t)   # intersection
    sums_ref[1] += jnp.sum(p + t)   # sum(pred) + sum(true), folded into one reduce

    @pl.when(h == pl.num_programs(1) - 1)
    def _finalize():
        # Lane-aligned (1, 8, 128) output block: partials on sublanes 0 and 1.
        sub = jax.lax.broadcasted_iota(jnp.int32, o_ref.shape, 1)
        o_ref[...] = jnp.where(
            sub == 0, sums_ref[0], jnp.where(sub == 1, sums_ref[1], 0.0)
        )


def _choose_block_h(H, W, bytes_per_elem, target_bytes=2 << 20):
    """Largest row-block that (a) evenly divides H (no partial/undefined tail),
    (b) is a multiple of 8 (sublane alignment) unless it is the full H, and
    (c) keeps both input tiles near ~2 MiB combined (fits 2x double-buffering
    inside every generation's default scoped VMEM)."""
    if H * W * bytes_per_elem <= target_bytes:
        return H
    best = None
    for bh in range(8, H, 8):
        if H % bh == 0 and bh * W * bytes_per_elem <= target_bytes:
            best = bh
    return best if best is not None else H


@jax.jit
def dice_loss_pallas(y_pred, y_true, lambda_=1.0):
    N, C, H, W = y_pred.shape
    bytes_per_elem = (
        jnp.dtype(y_pred.dtype).itemsize + jnp.dtype(y_true.dtype).itemsize
    )
    block_h = _choose_block_h(H, W, bytes_per_elem)
    n_hb = H // block_h

    # Scoped-VMEM budget: 2 pipeline buffers per input tile + output blocks.
    tile_bytes = block_h * W * bytes_per_elem
    vmem_needed = 2 * tile_bytes + 2 * 8 * 128 * 4 + (1 << 20)
    vmem_limit = None
    if vmem_needed > (14 << 20):
        # Only raise the limit when the fallback full-image block is big;
        # cap below v7x's 64 MiB physical VMEM.
        vmem_limit = int(min(vmem_needed, 60 << 20))

    partials = pl.pallas_call(
        _dice_partial_kernel,
        out_shape=jax.ShapeDtypeStruct((N, 8, 128), jnp.float32),
        grid_spec=pltpu.PrefetchScalarGridSpec(
            num_scalar_prefetch=0,
            grid=(N, n_hb),
            in_specs=[
                # Channel 0 pinned via index_map; only channel-0 bytes are DMA'd.
                pl.BlockSpec((1, 1, block_h, W), lambda i, h: (i, 0, h, 0)),
                pl.BlockSpec((1, 1, block_h, W), lambda i, h: (i, 0, h, 0)),
            ],
            out_specs=pl.BlockSpec((1, 8, 128), lambda i, h: (i, 0, 0)),
            scratch_shapes=[pltpu.SMEM((2,), jnp.float32)],
        ),
        compiler_params=pltpu.CompilerParams(
            # Batch axis parallel (v7x: 2 TensorCores split images);
            # row-block axis is the sequential reduction.
            dimension_semantics=("parallel", "arbitrary"),
            vmem_limit_bytes=vmem_limit,
        ),
    )(y_pred, y_true)

    # Tiny final combine in plain JAX (keeps lambda_ traced, no kernel recompile).
    intersection = jnp.sum(partials[:, 0, 0])
    total = jnp.sum(partials[:, 1, 0])
    dice = (2.0 * intersection + lambda_) / (total + lambda_)
    return 1.0 - dice


def dice_loss_ref(y_pred, y_true, lambda_=1.0):
    p = y_pred[:, 0].reshape(-1).astype(jnp.float32)
    t = y_true[:, 0].reshape(-1).astype(jnp.float32)
    inter = jnp.sum(p * t)
    dice = (2.0 * inter + lambda_) / (jnp.sum(p) + jnp.sum(t) + lambda_)
    return 1.0 - dice


if __name__ == "__main__":
    key = jax.random.PRNGKey(0)
    k1, k2 = jax.random.split(key)

    N, C, H, W = 2, 4, 16, 16
    # y_pred: probabilities in [0, 1]; y_true: binary mask (as float).
    y_pred = jax.nn.sigmoid(jax.random.normal(k1, (N, C, H, W), jnp.float32))
    y_true = (jax.random.uniform(k2, (N, C, H, W)) > 0.5).astype(jnp.float32)

    loss = dice_loss_pallas(y_pred, y_true, 1.0)
    loss = jax.block_until_ready(loss)

    ref = dice_loss_ref(y_pred, y_true, 1.0)
    assert jnp.allclose(loss, ref, atol=1e-5, rtol=1e-5), (loss, ref)

    print("KERNEL_OK")
</pallas_src>

<mosaic_0001>
module attributes {stable_mosaic.version = 11 : i64} {
  func.func @_dice_partial_kernel(%arg0: i32, %arg1: i32, %arg2: memref<1x1x16x16xf32, #tpu.memory_space<vmem>>, %arg3: memref<1x1x16x16xf32, #tpu.memory_space<vmem>>, %arg4: memref<1x8x128xf32, #tpu.memory_space<vmem>>, %arg5: memref<2xf32, #tpu.memory_space<smem>>) attributes {dimension_semantics = [#tpu.dimension_semantics<parallel>, #tpu.dimension_semantics<arbitrary>], iteration_bounds = array<i64: 2, 1>, scalar_prefetch = 0 : i64, scratch_operands = 1 : i64, tpu.core_type = #tpu.core_type<tc>, window_params = [{transform_indices = @transform_0, window_bounds = array<i64: 1, 1, 16, 16>}, {transform_indices = @transform_1, window_bounds = array<i64: 1, 1, 16, 16>}, {transform_indices = @transform_2, window_bounds = array<i64: 1, 8, 128>}]} {
    %c0_i32 = arith.constant 0 : i32
    %0 = arith.cmpi eq, %arg1, %c0_i32 : i32
    %1 = arith.extui %0 : i1 to i32
    %c0_i32_0 = arith.constant 0 : i32
    %2 = arith.cmpi ne, %1, %c0_i32_0 : i32
    scf.if %2 {
      %cst_14 = arith.constant 0.000000e+00 : f32
      %c0_15 = arith.constant 0 : index
      %24 = memref.load %arg5[%c0_15] : memref<2xf32, #tpu.memory_space<smem>>
      memref.store %cst_14, %arg5[%c0_15] : memref<2xf32, #tpu.memory_space<smem>>
      %cst_16 = arith.constant 0.000000e+00 : f32
      %c1_17 = arith.constant 1 : index
      %25 = memref.load %arg5[%c1_17] : memref<2xf32, #tpu.memory_space<smem>>
      memref.store %cst_16, %arg5[%c1_17] : memref<2xf32, #tpu.memory_space<smem>>
    } else {
    }
    %c0 = arith.constant 0 : index
    %c0_1 = arith.constant 0 : index
    %c0_2 = arith.constant 0 : index
    %c0_3 = arith.constant 0 : index
    %3 = vector.load %arg2[%c0, %c0_1, %c0_2, %c0_3] : memref<1x1x16x16xf32, #tpu.memory_space<vmem>>, vector<1x1x16x16xf32>
    %c0_4 = arith.constant 0 : index
    %c0_5 = arith.constant 0 : index
    %c0_6 = arith.constant 0 : index
    %c0_7 = arith.constant 0 : index
    %4 = vector.load %arg3[%c0_4, %c0_5, %c0_6, %c0_7] : memref<1x1x16x16xf32, #tpu.memory_space<vmem>>, vector<1x1x16x16xf32>
    %c0_8 = arith.constant 0 : index
    %5 = memref.load %arg5[%c0_8] : memref<2xf32, #tpu.memory_space<smem>>
    %6 = arith.mulf %3, %4 : vector<1x1x16x16xf32>
    %7 = vector.shape_cast %6 : vector<1x1x16x16xf32> to vector<1x1x1x16x16xf32>
    %cst = arith.constant dense<0.000000e+00> : vector<1xf32>
    %8 = vector.multi_reduction <add>, %7, %cst [1, 2, 3, 4] : vector<1x1x1x16x16xf32> to vector<1xf32>
    %9 = vector.shape_cast %8 : vector<1xf32> to vector<1x1x1x1x1xf32>
    %10 = vector.extract %9[0, 0, 0, 0, 0] : f32 from vector<1x1x1x1x1xf32>
    %11 = arith.addf %5, %10 : f32
    %c0_9 = arith.constant 0 : index
    %12 = memref.load %arg5[%c0_9] : memref<2xf32, #tpu.memory_space<smem>>
    memref.store %11, %arg5[%c0_9] : memref<2xf32, #tpu.memory_space<smem>>
    %c1 = arith.constant 1 : index
    %13 = memref.load %arg5[%c1] : memref<2xf32, #tpu.memory_space<smem>>
    %14 = arith.addf %3, %4 : vector<1x1x16x16xf32>
    %15 = vector.shape_cast %14 : vector<1x1x16x16xf32> to vector<1x1x1x16x16xf32>
    %cst_10 = arith.constant dense<0.000000e+00> : vector<1xf32>
    %16 = vector.multi_reduction <add>, %15, %cst_10 [1, 2, 3, 4] : vector<1x1x1x16x16xf32> to vector<1xf32>
    %17 = vector.shape_cast %16 : vector<1xf32> to vector<1x1x1x1x1xf32>
    %18 = vector.extract %17[0, 0, 0, 0, 0] : f32 from vector<1x1x1x1x1xf32>
    %19 = arith.addf %13, %18 : f32
    %c1_11 = arith.constant 1 : index
    %20 = memref.load %arg5[%c1_11] : memref<2xf32, #tpu.memory_space<smem>>
    memref.store %19, %arg5[%c1_11] : memref<2xf32, #tpu.memory_space<smem>>
    %c0_i32_12 = arith.constant 0 : i32
    %21 = arith.cmpi eq, %arg1, %c0_i32_12 : i32
    %22 = arith.extui %21 : i1 to i32
    %c0_i32_13 = arith.constant 0 : i32
    %23 = arith.cmpi ne, %22, %c0_i32_13 : i32
    scf.if %23 {
      %24 = tpu.iota {dimensions = array<i32: 1>} : vector<1x8x128xi32>
      %c0_i32_14 = arith.constant 0 : i32
      %25 = vector.broadcast %c0_i32_14 : i32 to vector<1x8x128xi32>
      %26 = arith.cmpi eq, %24, %25 : vector<1x8x128xi32>
      %c0_15 = arith.constant 0 : index
      %27 = memref.load %arg5[%c0_15] : memref<2xf32, #tpu.memory_space<smem>>
      %c1_i32 = arith.constant 1 : i32
      %28 = vector.broadcast %c1_i32 : i32 to vector<1x8x128xi32>
      %29 = arith.cmpi eq, %24, %28 : vector<1x8x128xi32>
      %c1_16 = arith.constant 1 : index
      %30 = memref.load %arg5[%c1_16] : memref<2xf32, #tpu.memory_space<smem>>
      %cst_17 = arith.constant 0.000000e+00 : f32
      %31 = vector.broadcast %30 : f32 to vector<1x8x128xf32>
      %32 = vector.broadcast %cst_17 : f32 to vector<1x8x128xf32>
      %33 = arith.select %29, %31, %32 : vector<1x8x128xi1>, vector<1x8x128xf32>
      %34 = vector.broadcast %27 : f32 to vector<1x8x128xf32>
      %35 = arith.select %26, %34, %33 : vector<1x8x128xi1>, vector<1x8x128xf32>
      %c0_18 = arith.constant 0 : index
      %c0_19 = arith.constant 0 : index
      %c0_20 = arith.constant 0 : index
      %36 = vector.load %arg4[%c0_18, %c0_19, %c0_20] : memref<1x8x128xf32, #tpu.memory_space<vmem>>, vector<1x8x128xf32>
      tpu.vector_store %arg4[%c0_18, %c0_19, %c0_20], %35 {strides = array<i32>} : memref<1x8x128xf32, #tpu.memory_space<vmem>>, vector<1x8x128xf32>,
    } else {
    }
    return
  }
  func.func @transform_0(%arg0: i32, %arg1: i32) -> (i32, i32, i32, i32) {
    %c0_i32 = arith.constant 0 : i32
    %c0_i32_0 = arith.constant 0 : i32
    %c0_i32_1 = arith.constant 0 : i32
    return %arg0, %c0_i32, %arg1, %c0_i32_0 : i32, i32, i32, i32
  }
  func.func @transform_1(%arg0: i32, %arg1: i32) -> (i32, i32, i32, i32) {
    %c0_i32 = arith.constant 0 : i32
    %c0_i32_0 = arith.constant 0 : i32
    %c0_i32_1 = arith.constant 0 : i32
    return %arg0, %c0_i32, %arg1, %c0_i32_0 : i32, i32, i32, i32
  }
  func.func @transform_2(%arg0: i32, %arg1: i32) -> (i32, i32, i32) {
    %c0_i32 = arith.constant 0 : i32
    %c0_i32_0 = arith.constant 0 : i32
    %c0_i32_1 = arith.constant 0 : i32
    return %arg0, %c0_i32, %c0_i32_0 : i32, i32, i32
  }
}

</mosaic_0001>

<llo_original>
// kernel: dice_loss_pallas.1
$region0: #{dice_loss_pallas.1}
  #allocation0 [shape = 'u32[]', space=smem, size = 0x4, offset = 0x4, fixed_abs, tag = 'smem constant byte address 0x4 - core index']
  #allocation1 [shape = 'u32[144,128]{1,0:T(1,128)}', space=vmem, size = 0x12000, scoped, tag = 'internal scratch']
  #allocation2 [shape = 'f32[2]{0:T(128)}', space=smem, size = 0x200, scoped, tag = 'scratch operand']
  %s0 = inlined_call_operand.hbm [shape: f32[2,4,16,16], index: 0, kind: input, shape index: {}]
  %s1 = inlined_call_operand.hbm [shape: f32[2,4,16,16], index: 1, kind: input, shape index: {}]
  %s2 = inlined_call_operand.vmem [shape: f32[2,8,128], index: 2, kind: output, shape index: {}]
  %s3 = sld [smem:[#allocation0]]
  $region57: #{dice_loss_pallas.1} parent=0
    _
  %s5 = ssub.s32 1, %s3
  %s6 = scalar_select 0, %s5, %s3
  $region1: #{dice_loss_pallas.1} parent=0
    #allocation3 [shape = 'u8[16384]{0}', space=vmem, size = 0x4000, scoped, tag = 'input window, operand 0']
    #allocation4 [shape = 's32[2]{0}', space=sflag, size = 0x8, scoped, tag = 'scoped memory for dice_loss_pallas.1']
    #allocation5 [shape = 'u8[16384]{0}', space=vmem, size = 0x4000, scoped, tag = 'input window, operand 1']
    #allocation6 [shape = 's32[2]{0}', space=sflag, size = 0x8, scoped, tag = 'scoped memory for dice_loss_pallas.1']
    %7 = vsyncpa [#allocation4], 0
    %s8 = scalar_lea.sflag [#allocation4], 1
    %9 = vsyncpa %s8, 0
    %10 = vsyncpa [#allocation6], 0
    %s11 = scalar_lea.sflag [#allocation6], 1
    %12 = vsyncpa %s11, 0
    loop: start=0, step=1, limit=4
    $region2: #{dice_loss_pallas.1} parent=1 // loop_pre_header
      _
    $region3: #{dice_loss_pallas.1} parent=1 // loop_header
      %s14 = sphi 0, %s18
      %p15 = scmp.ge.s32.totalorder %s14, 4
      %s21 = sphi 0, %s33
      %s22 = sphi 0, %s29
      %s23 = sphi 0, %s21
      %s24 = sphi 0, %s22
      %s25 = sphi 0, %s23
      %s26 = sphi 0, %s24
      %s38 = sphi 0, %s40
      %s41 = sphi 0, %s38
      %s42 = sphi 0, %s41
      %s58 = sphi 0, %s42
      %s66 = sphi 0, %s68
      %s69 = sphi 0, %s66
      %s70 = sphi 0, %s69
      %s86 = sphi 0, %s70
      %s92 = sphi 0, %s94
      %s95 = sphi 0, %s92
      %s96 = sphi 0, %s95
      %s112 = sphi 0, %s96
    $region4: #{dice_loss_pallas.1} parent=1 // loop_header_branch
      %17 = sbr.rel (%p15) target = $region8
    $region5: #{dice_loss_pallas.1} parent=1 // loop_body
      %s19 = ssub.s32 %s14, 1
      %s20 = ssub.s32 %s14, 2
      %s27 = sadd.s32 1, %s22
      %p28 = scmp.ge.s32.totalorder %s27, 1
      %s29 = scalar_select %p28, 0, %s27
      %s30 = sadd.s32 1, %s21
      %s31 = scalar_select %p28, %s30, %s21
      %p32 = scmp.ge.s32.totalorder %s31, 2
      %s33 = scalar_select %p32, 0, %s31
      %s34 = ssub.s32 %s21, %s33
      %s35 = ssub.s32 %s22, %s29
      %s36 = sor.u32 %s34, %s35
      %p37 = scmp.eq.s32.totalorder %s36, 0
      %s39 = sadd.s32 %s38, 1
      %s40 = scalar_select %p37, %s38, %s39
      %p43 = pneg %p37
      %p44 = scmp.eq.s32.totalorder %s14, 1
      %p45 = por %p43, %p44
      %p46 = scmp.ne.s32.totalorder %s38, %s41
      %p47 = scmp.eq.s32.totalorder %s14, 0
      %p48 = por %p46, %p47
      %p49 = scmp.ne.s32.totalorder %s38, %s41
      %p50 = scmp.eq.s32.totalorder %s19, 1
      %p51 = por %p49, %p50
      %p52 = scmp.ne.s32.totalorder %s41, %s42
      %p53 = scmp.eq.s32.totalorder %s19, 0
      %p54 = por %p52, %p53
      %p55 = scmp.ne.s32.totalorder %s41, %s42
      %p56 = scmp.eq.s32.totalorder %s20, 1
      %p57 = por %p55, %p56
      %p59 = scmp.ne.s32.totalorder %s42, %s58
      %p60 = scmp.eq.s32.totalorder %s20, 0
      %p61 = por %p59, %p60
      %s62 = ssub.s32 %s21, %s33
      %s63 = ssub.s32 %s22, %s29
      %s64 = sor.u32 %s62, %s63
      %p65 = scmp.eq.s32.totalorder %s64, 0
      %s67 = sadd.s32 %s66, 1
      %s68 = scalar_select %p65, %s66, %s67
      %p71 = pneg %p65
      %p72 = scmp.eq.s32.totalorder %s14, 1
      %p73 = por %p71, %p72
      %p74 = scmp.ne.s32.totalorder %s66, %s69
      %p75 = scmp.eq.s32.totalorder %s14, 0
      %p76 = por %p74, %p75
      %p77 = scmp.ne.s32.totalorder %s66, %s69
      %p78 = scmp.eq.s32.totalorder %s19, 1
      %p79 = por %p77, %p78
      %p80 = scmp.ne.s32.totalorder %s69, %s70
      %p81 = scmp.eq.s32.totalorder %s19, 0
      %p82 = por %p80, %p81
      %p83 = scmp.ne.s32.totalorder %s69, %s70
      %p84 = scmp.eq.s32.totalorder %s20, 1
      %p85 = por %p83, %p84
      %p87 = scmp.ne.s32.totalorder %s70, %s86
      %p88 = scmp.eq.s32.totalorder %s20, 0
      %p89 = por %p87, %p88
      %s90 = ssub.s32 %s21, %s33
      %p91 = scmp.eq.s32.totalorder %s90, 0
      %s93 = sadd.s32 %s92, 1
      %s94 = scalar_select %p91, %s92, %s93
      %p97 = pneg %p91
      %p98 = scmp.eq.s32.totalorder %s14, 1
      %p99 = por %p97, %p98
      %p100 = scmp.ne.s32.totalorder %s92, %s95
      %p101 = scmp.eq.s32.totalorder %s14, 0
      %p102 = por %p100, %p101
      %p103 = scmp.ne.s32.totalorder %s92, %s95
      %p104 = scmp.eq.s32.totalorder %s19, 1
      %p105 = por %p103, %p104
      %p106 = scmp.ne.s32.totalorder %s95, %s96
      %p107 = scmp.eq.s32.totalorder %s19, 0
      %p108 = por %p106, %p107
      %p109 = scmp.ne.s32.totalorder %s95, %s96
      %p110 = scmp.eq.s32.totalorder %s20, 1
      %p111 = por %p109, %p110
      %p113 = scmp.ne.s32.totalorder %s96, %s112
      %p114 = scmp.eq.s32.totalorder %s20, 0
      %p115 = por %p113, %p114
      %p116 = scmp.le.s32.totalorder 1, %s14
      %p117 = scmp.lt.s32.totalorder %s14, 3
      %p118 = pnand %p116, %p117
      %p119 = pneg %p118
      // Predicated region
      $region9: #{dice_loss_pallas.1} parent=5 // pred_check
        _
      $region10: #{dice_loss_pallas.1} parent=5 // pred_check_branch
        %121 = sbr.rel (%p118) target = $region12
      $region11: #{dice_loss_pallas.1} parent=5 // pred_region
        %s122 = ssub.s32 %s14, 1
      $region12: #{dice_loss_pallas.1} parent=5 // pred_fallthru
        _
      %p123 = scmp.lt.s32.totalorder %s14, 2
      // Predicated region
      $region13: #{dice_loss_pallas.1} parent=5 // pred_check
        %p124 = pneg %p123
      $region14: #{dice_loss_pallas.1} parent=5 // pred_check_branch
        %126 = sbr.rel (%p124) target = $region16
      $region15: #{dice_loss_pallas.1} parent=5 // pred_region
        // Predicated region
        $region17: #{dice_loss_pallas.1} parent=15 // pred_check
          %p127 = pneg %p48
        $region18: #{dice_loss_pallas.1} parent=15 // pred_check_branch
          %129 = sbr.rel (%p127) target = $region20
        $region19: #{dice_loss_pallas.1} parent=15 // pred_region
          %s130 = sand.u32 %s38, 1
          %s131 = scalar_lea.sflag [#allocation4], %s130
          %s132 = sand.u32 %s38, 1
          %s133 = smul.addr %s132, 16
          %s134 = scalar_lea.vmem [#allocation3], %s133
          %s135 = smul.u32 2, %s22
          %s137 = ssub.s32 256, 256
          %138 = vsyncadd %s131, %s137
          %s139 = smul.addr %s21, 8
          %s140 = sadd.s32 %s135, %s139
          %s141 = smul.addr %s140, 128
          %s142 = scalar_lea.hbm %s0, %s141
          %s143 = sshll.u32 %s134, 4
          %s144 = int_to_ptr.vmem [resolvable:$true] %s143
          %149 = dma.hbm_to_vmem [thread:$0]  %s142, 256, %s144, %s131, 128, 128, 8
        $region20: #{dice_loss_pallas.1} parent=15 // pred_fallthru
          _
        // Predicated region
        $region21: #{dice_loss_pallas.1} parent=15 // pred_check
          %p150 = pneg %p76
        $region22: #{dice_loss_pallas.1} parent=15 // pred_check_branch
          %152 = sbr.rel (%p150) target = $region24
        $region23: #{dice_loss_pallas.1} parent=15 // pred_region
          %s153 = sand.u32 %s66, 1
          %s154 = scalar_lea.sflag [#allocation6], %s153
          %s155 = sand.u32 %s66, 1
          %s156 = smul.addr %s155, 16
          %s157 = scalar_lea.vmem [#allocation5], %s156
          %s158 = smul.u32 2, %s22
          %s160 = ssub.s32 256, 256
          %161 = vsyncadd %s154, %s160
          %s162 = smul.addr %s21, 8
          %s163 = sadd.s32 %s158, %s162
          %s164 = smul.addr %s163, 128
          %s165 = scalar_lea.hbm %s1, %s164
          %s166 = sshll.u32 %s157, 4
          %s167 = int_to_ptr.vmem [resolvable:$true] %s166
          %172 = dma.hbm_to_vmem [thread:$0]  %s165, 256, %s167, %s154, 128, 128, 8
        $region24: #{dice_loss_pallas.1} parent=15 // pred_fallthru
          _
      $region16: #{dice_loss_pallas.1} parent=5 // pred_fallthru
        _
      %p173 = scmp.le.s32.totalorder 1, %s14
      %p174 = scmp.lt.s32.totalorder %s14, 3
      %p175 = pnand %p173, %p174
      %p176 = pneg %p175
      // Predicated region
      $region25: #{dice_loss_pallas.1} parent=5 // pred_check
        _
      $region26: #{dice_loss_pallas.1} parent=5 // pred_check_branch
        %178 = sbr.rel (%p175) target = $region28
      $region27: #{dice_loss_pallas.1} parent=5 // pred_region
        %s179 = ssub.s32 %s14, 1
        %s180 = sand.u32 %s41, 1
        %s181 = scalar_lea.sflag [#allocation4], %s180
        %s182 = sand.u32 %s41, 1
        %s183 = smul.addr %s182, 16
        %s184 = scalar_lea.vmem [#allocation3], %s183
        // Predicated region
        $region29: #{dice_loss_pallas.1} parent=27 // pred_check
          %p185 = pneg %p54
        $region30: #{dice_loss_pallas.1} parent=27 // pred_check_branch
          %187 = sbr.rel (%p185) target = $region32
        $region31: #{dice_loss_pallas.1} parent=27 // pred_region
          %188 = dma.done %s181, 256
        $region32: #{dice_loss_pallas.1} parent=27 // pred_fallthru
          _
        %s189 = sand.u32 %s69, 1
        %s190 = scalar_lea.sflag [#allocation6], %s189
        %s191 = sand.u32 %s69, 1
        %s192 = smul.addr %s191, 16
        %s193 = scalar_lea.vmem [#allocation5], %s192
        // Predicated region
        $region33: #{dice_loss_pallas.1} parent=27 // pred_check
          %p194 = pneg %p82
        $region34: #{dice_loss_pallas.1} parent=27 // pred_check_branch
          %196 = sbr.rel (%p194) target = $region36
        $region35: #{dice_loss_pallas.1} parent=27 // pred_region
          %197 = dma.done %s190, 256
        $region36: #{dice_loss_pallas.1} parent=27 // pred_fallthru
          _
        %s198 = sand.u32 %s41, 1
        %s199 = scalar_lea.sflag [#allocation4], %s198
        %s200 = sand.u32 %s41, 1
        %s201 = smul.addr %s200, 16
        %s202 = scalar_lea.vmem [#allocation3], %s201
        %p203 = pneg %p54
        %p204 = pneg %p51
        %s205 = sand.u32 %s69, 1
        %s206 = scalar_lea.sflag [#allocation6], %s205
        %s207 = sand.u32 %s69, 1
        %s208 = smul.addr %s207, 16
        %s209 = scalar_lea.vmem [#allocation5], %s208
        %p210 = pneg %p82
        %p211 = pneg %p79
        %p212 = pneg %p108
        %p213 = pneg %p105
        %p214 = scmp.lt.s32.totalorder %s23, 1
        %s215 = scalar_select %p214, %s23, 1
        %s216 = smul.addr %s215, 8
        %s217 = scalar_lea.vmem %s2, %s216
        %s218 = smul.u32 2, %s24
        %s219 = smul.u32 2, %s24
        %p220 = scmp.lt.s32.totalorder %s23, 1
        %s221 = scalar_select %p220, %s23, 1
        %s222 = smul.addr %s221, 8
        %s223 = scalar_lea.vmem %s2, %s222
        %p224 = scmp.eq.s32.totalorder %s24, 0
        // Predicated region
        $region37: #{dice_loss_pallas.1} parent=27 // pred_check
          %p225 = pneg %p224
        $region38: #{dice_loss_pallas.1} parent=27 // pred_check_branch
          %227 = sbr.rel (%p225) target = $region40
        $region39: #{dice_loss_pallas.1} parent=27 // pred_region
          %s228 = scalar_lea.smem [#allocation2], 0
          %229 = sst [smem:[%s228]] 0.0
          %s230 = scalar_lea.smem [#allocation2], 1
          %231 = sst [smem:[%s230]] 0.0
        $region40: #{dice_loss_pallas.1} parent=27 // pred_fallthru
          _
        %v232 = vld [vmem:[%s184] sm:$0xff]
        %v233 = vld [vmem:[%s184 + $0x8] sm:$0xff]
        %v234 = vld [vmem:[%s193] sm:$0xff]
        %v235 = vld [vmem:[%s193 + $0x8] sm:$0xff]
        %s236 = sld [smem:[#allocation2]]
        %v237 = vmul.f32 %v232, %v234
        %v238 = vmul.f32 %v233, %v235
        %vm239 = vcmask 130048
        %v240 = vsel %vm239, %v237, 0.0
        %v241 = vsel %vm239, %v238, 0.0
        %v242 = vadd.f32 %v240, %v241
        %243 = vadd.xlane.f32.xlu0 %v242
        %v244 = vpop.xlane.xlu0 %243
        %v245 = vrot.slane %v244, 4
        %v246 = vadd.f32 %v244, %v245
        %v247 = vrot.slane %v246, 2
        %v248 = vadd.f32 %v246, %v247
        %v249 = vrot.slane %v248, 1
        %v250 = vadd.f32 %v248, %v249
        %s251 = vtos %v250
        %s252 = sadd.f32 %s236, %s251
        %s253 = scalar_lea.smem [#allocation2], 0
        %254 = sst [smem:[%s253]] %s252
        %s255 = sld [smem:[#allocation2 + $0x1]]
        %v256 = vadd.f32 %v232, %v234
        %v257 = vadd.f32 %v233, %v235
        %v258 = vsel %vm239, %v256, 0.0
        %v259 = vsel %vm239, %v257, 0.0
        %v260 = vadd.f32 %v258, %v259
        %261 = vadd.xlane.f32.xlu0 %v260
        %v262 = vpop.xlane.xlu0 %261
        %v263 = vrot.slane %v262, 4
        %v264 = vadd.f32 %v262, %v263
        %v265 = vrot.slane %v264, 2
        %v266 = vadd.f32 %v264, %v265
        %v267 = vrot.slane %v266, 1
        %v268 = vadd.f32 %v266, %v267
        %s269 = vtos %v268
        %s270 = sadd.f32 %s255, %s269
        %s271 = scalar_lea.smem [#allocation2], 1
        %272 = sst [smem:[%s271]] %s270
        // Predicated region
        $region41: #{dice_loss_pallas.1} parent=27 // pred_check
          %p273 = pneg %p224
        $region42: #{dice_loss_pallas.1} parent=27 // pred_check_branch
          %275 = sbr.rel (%p273) target = $region44
        $region43: #{dice_loss_pallas.1} parent=27 // pred_region
          %v276 = vlaneseq
          %v277 = vshrl.u32 %v276, 7
          %vm278 = vcmp.eq.s32.totalorder %v277, 0
          %s279 = sld [smem:[#allocation2]]
          %vm280 = vcmp.eq.s32.totalorder %v277, 1
          %s281 = sld [smem:[#allocation2 + $0x1]]
          %v282 = vstv %s281
          %v283 = vsel %vm280, %v282, 0.0
          %v284 = vstv %s279
          %v285 = vsel %vm278, %v284, %v283
          %286 = vst [vmem:[%s223] sm:$0xff] %v285
        $region44: #{dice_loss_pallas.1} parent=27 // pred_fallthru
          _
        %p287 = scmp.lt.s32.totalorder %s23, 1
        %s288 = scalar_select %p287, %s23, 1
        %s289 = smul.addr %s288, 8
        %s290 = scalar_lea.vmem %s2, %s289
        // Predicated region
        $region45: #{dice_loss_pallas.1} parent=27 // pred_check
          %p291 = pneg %p105
        $region46: #{dice_loss_pallas.1} parent=27 // pred_check_branch
          %293 = sbr.rel (%p291) target = $region48
        $region47: #{dice_loss_pallas.1} parent=27 // pred_region
          _
        $region48: #{dice_loss_pallas.1} parent=27 // pred_fallthru
          _
      $region28: #{dice_loss_pallas.1} parent=5 // pred_fallthru
        _
      %p294 = scmp.le.s32.totalorder 2, %s14
      // Predicated region
      $region49: #{dice_loss_pallas.1} parent=5 // pred_check
        %p295 = pneg %p294
      $region50: #{dice_loss_pallas.1} parent=5 // pred_check_branch
        %297 = sbr.rel (%p295) target = $region52
      $region51: #{dice_loss_pallas.1} parent=5 // pred_region
        %s298 = ssub.s32 %s14, 2
        // Predicated region
        $region53: #{dice_loss_pallas.1} parent=51 // pred_check
          %p299 = pneg %p111
        $region54: #{dice_loss_pallas.1} parent=51 // pred_check_branch
          %301 = sbr.rel (%p299) target = $region56
        $region55: #{dice_loss_pallas.1} parent=51 // pred_region
          %p302 = scmp.lt.s32.totalorder %s25, 1
          %s303 = scalar_select %p302, %s25, 1
          %s304 = smul.addr %s303, 8
          %s305 = scalar_lea.vmem %s2, %s304
        $region56: #{dice_loss_pallas.1} parent=51 // pred_fallthru
          _
      $region52: #{dice_loss_pallas.1} parent=5 // pred_fallthru
        _
    $region6: #{dice_loss_pallas.1} parent=1 // loop_footer
      %s18 = sadd.s32 1, %s14
    $region7: #{dice_loss_pallas.1} parent=1 // loop_footer_branch
      %13 = sbr.rel target = $region3
    $region8: #{dice_loss_pallas.1} parent=1 // loop_exit
      _
    %306 = vsyncpa [#allocation4], 1
    %s307 = scalar_lea.sflag [#allocation4], 1
    %308 = vsyncpa %s307, 1
    %309 = vsyncpa [#allocation6], 1
    %s310 = scalar_lea.sflag [#allocation6], 1
    %311 = vsyncpa %s310, 1

</llo_original>
